<compile_context>
chip_gen: v7x
topology: tpu7x:2x2x1
jax: 0.10.0
libtpu: 0.0.40
codegen_flags: <defaults>
</compile_context>

<pallas_src>
import math
import jax
import jax.numpy as jnp
from jax.experimental import pallas as pl
from jax.experimental.pallas import tpu as pltpu


def _pick_tile(n, cap, align):
    """Largest t <= cap with n % t == 0 and (t % align == 0 or t == n)."""
    t = min(cap, n)
    for cand in range(t, 0, -1):
        if n % cand == 0 and (cand % align == 0 or cand == n):
            return cand
    return n


def _make_kernel(h_resident, tk):
    def kernel(adj_ref, h_ref, b_ref, o_ref, acc_ref):
        k = pl.program_id(1)

        @pl.when(k == 0)
        def _():
            acc_ref[...] = jnp.zeros_like(acc_ref)

        if h_resident:
            # Full projected-feature matrix is resident in VMEM; slice the
            # rows for this reduction block.
            row = pl.multiple_of(k * tk, tk)
            h_tile = h_ref[pl.ds(row, tk), :]
        else:
            h_tile = h_ref[...]

        # Aggregation: acc += adj_tile @ h_tile   (bf16 x bf16 -> f32 on MXU)
        acc_ref[...] += jnp.dot(adj_ref[...], h_tile,
                                preferred_element_type=jnp.float32)

        @pl.when(k == pl.num_programs(1) - 1)
        def _():
            o_ref[...] = (acc_ref[...] + b_ref[...]).astype(o_ref.dtype)

    return kernel


def gcn_conv(x, adj, weight, bias, *, tm=None, tk=None):
    N, in_c = x.shape
    out_c = weight.shape[1]
    assert adj.shape == (N, N)

    # --- lane-dense padded output width (multiple of 128 lanes) ------------
    out_c_pad = ((out_c + 127) // 128) * 128
    w_pad = jnp.zeros((in_c, out_c_pad), jnp.float32).at[:, :out_c].set(
        weight.astype(jnp.float32))
    b_pad = jnp.zeros((1, out_c_pad), jnp.float32).at[:, :out_c].set(
        bias.astype(jnp.float32).reshape(1, out_c))

    # --- project first (wrapper): h = x @ W, streamed to kernel as bf16 ----
    h = jnp.dot(x.astype(jnp.float32), w_pad,
                preferred_element_type=jnp.float32).astype(jnp.bfloat16)
    adj_bf = adj.astype(jnp.bfloat16)

    # --- tile selection (exact divisors: no ragged tiles) -------------------
    if tk is None:
        tk = _pick_tile(N, 1024, 128)           # adj lane/streaming axis: big
    if tm is None:
        tm_cap = 512
        if N // min(tm_cap, N) < 2 and N >= 16:
            tm_cap = max(N // 2, 8)             # keep >= 2 row tiles (v7x 2 TCs)
        tm = _pick_tile(N, tm_cap, 8)
    assert N % tm == 0 and N % tk == 0, "tiles must divide N exactly"

    # Keep h fully resident in VMEM when it is small enough.
    h_resident = (N * out_c_pad * 2) <= (8 << 20)

    # --- VMEM budget (double-buffered inputs/output + scratch) -------------
    vmem_bytes = (2 * tm * tk * 2                                  # adj (bf16)
                  + (2 * N * out_c_pad * 2 if h_resident
                     else 2 * tk * out_c_pad * 2)                  # h   (bf16)
                  + 2 * tm * out_c_pad * x.dtype.itemsize          # out
                  + tm * out_c_pad * 4                             # f32 acc
                  + 2 * out_c_pad * 4)                             # bias
    vmem_limit = min(max(int(vmem_bytes * 1.5), 16 << 20), 48 << 20)

    if h_resident:
        h_spec = pl.BlockSpec((N, out_c_pad), lambda i, k: (0, 0))
    else:
        h_spec = pl.BlockSpec((tk, out_c_pad), lambda i, k: (k, 0))

    grid = (N // tm, N // tk)

    out_pad = pl.pallas_call(
        _make_kernel(h_resident, tk),
        out_shape=jax.ShapeDtypeStruct((N, out_c_pad), x.dtype),
        grid_spec=pltpu.PrefetchScalarGridSpec(
            num_scalar_prefetch=0,
            grid=grid,
            in_specs=[
                pl.BlockSpec((tm, tk), lambda i, k: (i, k)),         # adj tile
                h_spec,                                              # h = x @ W
                pl.BlockSpec((1, out_c_pad), lambda i, k: (0, 0)),   # bias
            ],
            out_specs=pl.BlockSpec((tm, out_c_pad), lambda i, k: (i, 0)),
            scratch_shapes=[pltpu.VMEM((tm, out_c_pad), jnp.float32)],
        ),
        compiler_params=pltpu.CompilerParams(
            dimension_semantics=("parallel", "arbitrary"),
            vmem_limit_bytes=vmem_limit),
    )(adj_bf, h, b_pad)

    # TODO(synk): for sparse real-world adjacencies, use scalar prefetch of
    # per-row-tile nonzero block lists to skip all-zero adj tiles.
    return out_pad[:, :out_c]


def glorot(key, shape):
    fan_in, fan_out = shape
    std = math.sqrt(6.0 / (fan_in + fan_out))
    return jax.random.uniform(key, shape, jnp.float32, -std, std)


if __name__ == "__main__":
    # Small, tile-friendly shapes.
    N, in_channels, out_channels = 256, 64, 32

    key = jax.random.PRNGKey(0)
    k_x, k_adj, k_w, k_rw = jax.random.split(key, 4)

    x = jax.random.normal(k_x, (N, in_channels), jnp.float32)
    adj = jax.random.uniform(k_adj, (N, N), jnp.float32)

    # Deterministic parameter init matching reset_parameters():
    weight = glorot(k_w, (in_channels, out_channels))
    root_weight = glorot(k_rw, (in_channels, out_channels))  # unused in forward
    bias = jnp.zeros((out_channels,), jnp.float32)

    out = gcn_conv(x, adj, weight, bias)
    out = jax.block_until_ready(out)
    assert out.shape == (N, out_channels)

    # Matched-precision reference (bf16 streaming inputs, f32 accumulation).
    h_bf = jnp.dot(x, weight,
                   preferred_element_type=jnp.float32).astype(jnp.bfloat16)
    ref_bf = jnp.dot(adj.astype(jnp.bfloat16), h_bf,
                     preferred_element_type=jnp.float32) + bias
    assert jnp.allclose(out, ref_bf, atol=1e-2, rtol=1e-2)

    # Full-precision semantic reference (loose tol: bf16 input rounding).
    ref_f32 = adj @ x @ weight + bias
    assert jnp.allclose(out, ref_f32, atol=2.5e-1, rtol=2e-2)

    print("KERNEL_OK")
</pallas_src>

<mosaic_0001>
module attributes {stable_mosaic.version = 11 : i64} {
  func.func @kernel(%arg0: i32, %arg1: i32, %arg2: memref<128x256xbf16, #tpu.memory_space<vmem>>, %arg3: memref<256x128xbf16, #tpu.memory_space<vmem>>, %arg4: memref<1x128xf32, #tpu.memory_space<vmem>>, %arg5: memref<128x128xf32, #tpu.memory_space<vmem>>, %arg6: memref<128x128xf32, #tpu.memory_space<vmem>>) attributes {dimension_semantics = [#tpu.dimension_semantics<parallel>, #tpu.dimension_semantics<arbitrary>], iteration_bounds = array<i64: 2, 1>, scalar_prefetch = 0 : i64, scratch_operands = 1 : i64, tpu.core_type = #tpu.core_type<tc>, window_params = [{transform_indices = @transform_0, window_bounds = array<i64: 128, 256>}, {pipeline_mode = #tpu.pipeline_mode<synchronous>, transform_indices = @transform_1, window_bounds = array<i64: 256, 128>}, {pipeline_mode = #tpu.pipeline_mode<synchronous>, transform_indices = @transform_2, window_bounds = array<i64: 1, 128>}, {transform_indices = @transform_3, window_bounds = array<i64: 128, 128>}]} {
    %c0_i32 = arith.constant 0 : i32
    %0 = arith.cmpi eq, %arg1, %c0_i32 : i32
    %1 = arith.extui %0 : i1 to i32
    %c0_i32_0 = arith.constant 0 : i32
    %2 = arith.cmpi ne, %1, %c0_i32_0 : i32
    scf.if %2 {
      %cst_9 = arith.constant 0.000000e+00 : f32
      %15 = vector.broadcast %cst_9 : f32 to vector<128x128xf32>
      %c0_10 = arith.constant 0 : index
      %c0_11 = arith.constant 0 : index
      %16 = vector.load %arg6[%c0_10, %c0_11] : memref<128x128xf32, #tpu.memory_space<vmem>>, vector<128x128xf32>
      tpu.vector_store %arg6[%c0_10, %c0_11], %15 {strides = array<i32>} : memref<128x128xf32, #tpu.memory_space<vmem>>, vector<128x128xf32>,
    } else {
    }
    %c256_i32 = arith.constant 256 : i32
    %3 = arith.muli %arg1, %c256_i32 : i32
    %4 = tpu.assume_multiple %3, 256 : i32
    %5 = arith.index_cast %4 : i32 to index
    %c0 = arith.constant 0 : index
    %6 = vector.load %arg3[%5, %c0] : memref<256x128xbf16, #tpu.memory_space<vmem>>, vector<256x128xbf16>
    %c0_1 = arith.constant 0 : index
    %c0_2 = arith.constant 0 : index
    %7 = vector.load %arg6[%c0_1, %c0_2] : memref<128x128xf32, #tpu.memory_space<vmem>>, vector<128x128xf32>
    %c0_3 = arith.constant 0 : index
    %c0_4 = arith.constant 0 : index
    %8 = vector.load %arg2[%c0_3, %c0_4] : memref<128x256xbf16, #tpu.memory_space<vmem>>, vector<128x256xbf16>
    %cst = arith.constant dense<0.000000e+00> : vector<128x128xf32>
    %9 = tpu.matmul %8, %6, %cst {dimension_numbers = #tpu.dot_dimension_numbers<[1], [0], [0], [1], [0, 0, 1, 1], [], []>} : vector<128x256xbf16>, vector<256x128xbf16>, vector<128x128xf32> -> vector<128x128xf32>
    %10 = arith.addf %7, %9 : vector<128x128xf32>
    %c0_5 = arith.constant 0 : index
    %c0_6 = arith.constant 0 : index
    %11 = vector.load %arg6[%c0_5, %c0_6] : memref<128x128xf32, #tpu.memory_space<vmem>>, vector<128x128xf32>
    tpu.vector_store %arg6[%c0_5, %c0_6], %10 {strides = array<i32>} : memref<128x128xf32, #tpu.memory_space<vmem>>, vector<128x128xf32>,
    %c0_i32_7 = arith.constant 0 : i32
    %12 = arith.cmpi eq, %arg1, %c0_i32_7 : i32
    %13 = arith.extui %12 : i1 to i32
    %c0_i32_8 = arith.constant 0 : i32
    %14 = arith.cmpi ne, %13, %c0_i32_8 : i32
    scf.if %14 {
      %c0_9 = arith.constant 0 : index
      %c0_10 = arith.constant 0 : index
      %15 = vector.load %arg6[%c0_9, %c0_10] : memref<128x128xf32, #tpu.memory_space<vmem>>, vector<128x128xf32>
      %c0_11 = arith.constant 0 : index
      %c0_12 = arith.constant 0 : index
      %16 = vector.load %arg4[%c0_11, %c0_12] : memref<1x128xf32, #tpu.memory_space<vmem>>, vector<1x128xf32>
      %17 = vector.broadcast %16 : vector<1x128xf32> to vector<128x128xf32>
      %18 = arith.addf %15, %17 : vector<128x128xf32>
      %c0_13 = arith.constant 0 : index
      %c0_14 = arith.constant 0 : index
      %19 = vector.load %arg5[%c0_13, %c0_14] : memref<128x128xf32, #tpu.memory_space<vmem>>, vector<128x128xf32>
      tpu.vector_store %arg5[%c0_13, %c0_14], %18 {strides = array<i32>} : memref<128x128xf32, #tpu.memory_space<vmem>>, vector<128x128xf32>,
    } else {
    }
    return
  }
  func.func @transform_0(%arg0: i32, %arg1: i32) -> (i32, i32) {
    %c0_i32 = arith.constant 0 : i32
    return %arg0, %arg1 : i32, i32
  }
  func.func @transform_1(%arg0: i32, %arg1: i32) -> (i32, i32) {
    %c0_i32 = arith.constant 0 : i32
    %c0_i32_0 = arith.constant 0 : i32
    %c0_i32_1 = arith.constant 0 : i32
    return %c0_i32, %c0_i32_0 : i32, i32
  }
  func.func @transform_2(%arg0: i32, %arg1: i32) -> (i32, i32) {
    %c0_i32 = arith.constant 0 : i32
    %c0_i32_0 = arith.constant 0 : i32
    %c0_i32_1 = arith.constant 0 : i32
    return %c0_i32, %c0_i32_0 : i32, i32
  }
  func.func @transform_3(%arg0: i32, %arg1: i32) -> (i32, i32) {
    %c0_i32 = arith.constant 0 : i32
    %c0_i32_0 = arith.constant 0 : i32
    return %arg0, %c0_i32 : i32, i32
  }
}

</mosaic_0001>

<llo_original>
// kernel: tpu_custom_call.1
$region0: #{tpu_custom_call.1}
  #allocation0 [shape = 'u32[]', space=smem, size = 0x4, offset = 0x4, fixed_abs, tag = 'smem constant byte address 0x4 - core index']
  #allocation1 [shape = 'u32[144,128]{1,0:T(1,128)}', space=vmem, size = 0x12000, scoped, tag = 'internal scratch']
  #allocation2 [shape = 'f32[128,128]{1,0:T(8,128)}', space=vmem, size = 0x10000, scoped, tag = 'scratch operand']
  %s0 = inlined_call_operand.hbm [shape: bf16[256,256], index: 0, kind: input, shape index: {}]
  %s1 = inlined_call_operand.hbm [shape: bf16[256,128], index: 1, kind: input, shape index: {}]
  %s2 = inlined_call_operand.vmem [shape: f32[1,128], index: 2, kind: input, shape index: {}]
  %s3 = inlined_call_operand.hbm [shape: f32[256,128], index: 3, kind: output, shape index: {}]
  %s4 = sld [smem:[#allocation0]]
  $region61: #{tpu_custom_call.1} parent=0
    _
  %s6 = ssub.s32 1, %s4
  %s7 = scalar_select 0, %s6, %s4
  $region1: #{tpu_custom_call.1} parent=0
    #allocation3 [shape = 'u8[131072]{0}', space=vmem, size = 0x20000, scoped, tag = 'input window, operand 0']
    #allocation4 [shape = 's32[2]{0}', space=sflag, size = 0x8, scoped, tag = 'scoped memory for tpu_custom_call.1']
    #allocation5 [shape = 's32[2]{0}', space=sflag, size = 0x8, scoped, tag = 'scoped memory for tpu_custom_call.1']
    #allocation6 [shape = 'u8[65536]{0}', space=vmem, size = 0x10000, scoped, tag = 'input window, operand 1, single buffered']
    #allocation7 [shape = 's32[1]{0}', space=sflag, size = 0x4, scoped, tag = 'scoped memory for tpu_custom_call.1']
    #allocation8 [shape = 'u8[131072]{0}', space=vmem, size = 0x20000, scoped, tag = 'output window, operand 0']
    %8 = vsyncpa [#allocation4], 0
    %s9 = scalar_lea.sflag [#allocation4], 1
    %10 = vsyncpa %s9, 0
    %11 = vsyncpa [#allocation7], 0
    %12 = vsyncpa [#allocation5], 0
    %s13 = scalar_lea.sflag [#allocation5], 1
    %14 = vsyncpa %s13, 0
    loop: start=0, step=1, limit=4
    $region2: #{tpu_custom_call.1} parent=1 // loop_pre_header
      _
    $region3: #{tpu_custom_call.1} parent=1 // loop_header
      %s16 = sphi 0, %s20
      %p17 = scmp.ge.s32.totalorder %s16, 4
      %s23 = sphi 0, %s35
      %s24 = sphi 0, %s31
      %s25 = sphi 0, %s23
      %s26 = sphi 0, %s24
      %s27 = sphi 0, %s25
      %s28 = sphi 0, %s26
      %s40 = sphi 0, %s42
      %s43 = sphi 0, %s40
      %s44 = sphi 0, %s43
      %s60 = sphi 0, %s44
      %s64 = sphi 0, %s64
      %s66 = sphi 0, %s64
      %s67 = sphi 0, %s66
      %s81 = sphi 0, %s67
      %s85 = sphi 0, %s85
      %s87 = sphi 0, %s85
      %s88 = sphi 0, %s87
      %s102 = sphi 0, %s88
      %s108 = sphi 0, %s110
      %s111 = sphi 0, %s108
      %s112 = sphi 0, %s111
      %s128 = sphi 0, %s112
    $region4: #{tpu_custom_call.1} parent=1 // loop_header_branch
      %19 = sbr.rel (%p17) target = $region8
    $region5: #{tpu_custom_call.1} parent=1 // loop_body
      %s21 = ssub.s32 %s16, 1
      %s22 = ssub.s32 %s16, 2
      %s29 = sadd.s32 1, %s24
      %p30 = scmp.ge.s32.totalorder %s29, 1
      %s31 = scalar_select %p30, 0, %s29
      %s32 = sadd.s32 1, %s23
      %s33 = scalar_select %p30, %s32, %s23
      %p34 = scmp.ge.s32.totalorder %s33, 2
      %s35 = scalar_select %p34, 0, %s33
      %s36 = ssub.s32 %s23, %s35
      %s37 = ssub.s32 %s24, %s31
      %s38 = sor.u32 %s36, %s37
      %p39 = scmp.eq.s32.totalorder %s38, 0
      %s41 = sadd.s32 %s40, 1
      %s42 = scalar_select %p39, %s40, %s41
      %p45 = pneg %p39
      %p46 = scmp.eq.s32.totalorder %s16, 1
      %p47 = por %p45, %p46
      %p48 = scmp.ne.s32.totalorder %s40, %s43
      %p49 = scmp.eq.s32.totalorder %s16, 0
      %p50 = por %p48, %p49
      %p51 = scmp.ne.s32.totalorder %s40, %s43
      %p52 = scmp.eq.s32.totalorder %s21, 1
      %p53 = por %p51, %p52
      %p54 = scmp.ne.s32.totalorder %s43, %s44
      %p55 = scmp.eq.s32.totalorder %s21, 0
      %p56 = por %p54, %p55
      %p57 = scmp.ne.s32.totalorder %s43, %s44
      %p58 = scmp.eq.s32.totalorder %s22, 1
      %p59 = por %p57, %p58
      %p61 = scmp.ne.s32.totalorder %s44, %s60
      %p62 = scmp.eq.s32.totalorder %s22, 0
      %p63 = por %p61, %p62
      %s65 = sadd.s32 %s64, 1
      %p68 = scmp.eq.s32.totalorder %s16, 1
      %p69 = scmp.ne.s32.totalorder %s64, %s66
      %p70 = scmp.eq.s32.totalorder %s16, 0
      %p71 = por %p69, %p70
      %p72 = scmp.ne.s32.totalorder %s64, %s66
      %p73 = scmp.eq.s32.totalorder %s21, 1
      %p74 = por %p72, %p73
      %p75 = scmp.ne.s32.totalorder %s66, %s67
      %p76 = scmp.eq.s32.totalorder %s21, 0
      %p77 = por %p75, %p76
      %p78 = scmp.ne.s32.totalorder %s66, %s67
      %p79 = scmp.eq.s32.totalorder %s22, 1
      %p80 = por %p78, %p79
      %p82 = scmp.ne.s32.totalorder %s67, %s81
      %p83 = scmp.eq.s32.totalorder %s22, 0
      %p84 = por %p82, %p83
      %s86 = sadd.s32 %s85, 1
      %p89 = scmp.eq.s32.totalorder %s16, 1
      %p90 = scmp.ne.s32.totalorder %s85, %s87
      %p91 = scmp.eq.s32.totalorder %s16, 0
      %p92 = por %p90, %p91
      %p93 = scmp.ne.s32.totalorder %s85, %s87
      %p94 = scmp.eq.s32.totalorder %s21, 1
      %p95 = por %p93, %p94
      %p96 = scmp.ne.s32.totalorder %s87, %s88
      %p97 = scmp.eq.s32.totalorder %s21, 0
      %p98 = por %p96, %p97
      %p99 = scmp.ne.s32.totalorder %s87, %s88
      %p100 = scmp.eq.s32.totalorder %s22, 1
      %p101 = por %p99, %p100
      %p103 = scmp.ne.s32.totalorder %s88, %s102
      %p104 = scmp.eq.s32.totalorder %s22, 0
      %p105 = por %p103, %p104
      %s106 = ssub.s32 %s23, %s35
      %p107 = scmp.eq.s32.totalorder %s106, 0
      %s109 = sadd.s32 %s108, 1
      %s110 = scalar_select %p107, %s108, %s109
      %p113 = pneg %p107
      %p114 = scmp.eq.s32.totalorder %s16, 1
      %p115 = por %p113, %p114
      %p116 = scmp.ne.s32.totalorder %s108, %s111
      %p117 = scmp.eq.s32.totalorder %s16, 0
      %p118 = por %p116, %p117
      %p119 = scmp.ne.s32.totalorder %s108, %s111
      %p120 = scmp.eq.s32.totalorder %s21, 1
      %p121 = por %p119, %p120
      %p122 = scmp.ne.s32.totalorder %s111, %s112
      %p123 = scmp.eq.s32.totalorder %s21, 0
      %p124 = por %p122, %p123
      %p125 = scmp.ne.s32.totalorder %s111, %s112
      %p126 = scmp.eq.s32.totalorder %s22, 1
      %p127 = por %p125, %p126
      %p129 = scmp.ne.s32.totalorder %s112, %s128
      %p130 = scmp.eq.s32.totalorder %s22, 0
      %p131 = por %p129, %p130
      %p132 = scmp.le.s32.totalorder 1, %s16
      %p133 = scmp.lt.s32.totalorder %s16, 3
      %p134 = pnand %p132, %p133
      %p135 = pneg %p134
      // Predicated region
      $region9: #{tpu_custom_call.1} parent=5 // pred_check
        _
      $region10: #{tpu_custom_call.1} parent=5 // pred_check_branch
        %137 = sbr.rel (%p134) target = $region12
      $region11: #{tpu_custom_call.1} parent=5 // pred_region
        %s138 = ssub.s32 %s16, 1
        // Predicated region
        $region13: #{tpu_custom_call.1} parent=11 // pred_check
          %p139 = pneg %p77
        $region14: #{tpu_custom_call.1} parent=11 // pred_check_branch
          %141 = sbr.rel (%p139) target = $region16
        $region15: #{tpu_custom_call.1} parent=11 // pred_region
          %s143 = ssub.s32 2048, 2048
          %144 = vsyncadd [#allocation7], %s143
          %s145 = sshll.u32 [#allocation6], 4
          %s146 = int_to_ptr.vmem [resolvable:$true] %s145
          %151 = dma.hbm_to_vmem [thread:$0]  %s1, 2048, %s146, [#allocation7], 64, 64, 4
        $region16: #{tpu_custom_call.1} parent=11 // pred_fallthru
          _
        // Predicated region
        $region17: #{tpu_custom_call.1} parent=11 // pred_check
          %p152 = pneg %p98
        $region18: #{tpu_custom_call.1} parent=11 // pred_check_branch
          %154 = sbr.rel (%p152) target = $region20
        $region19: #{tpu_custom_call.1} parent=11 // pred_region
          _
        $region20: #{tpu_custom_call.1} parent=11 // pred_fallthru
          _
      $region12: #{tpu_custom_call.1} parent=5 // pred_fallthru
        _
      %p155 = scmp.lt.s32.totalorder %s16, 2
      // Predicated region
      $region21: #{tpu_custom_call.1} parent=5 // pred_check
        %p156 = pneg %p155
      $region22: #{tpu_custom_call.1} parent=5 // pred_check_branch
        %158 = sbr.rel (%p156) target = $region24
      $region23: #{tpu_custom_call.1} parent=5 // pred_region
        // Predicated region
        $region25: #{tpu_custom_call.1} parent=23 // pred_check
          %p159 = pneg %p50
        $region26: #{tpu_custom_call.1} parent=23 // pred_check_branch
          %161 = sbr.rel (%p159) target = $region28
        $region27: #{tpu_custom_call.1} parent=23 // pred_region
          %s162 = sand.u32 %s40, 1
          %s163 = scalar_lea.sflag [#allocation4], %s162
          %s164 = sand.u32 %s40, 1
          %s165 = smul.addr %s164, 128
          %s166 = scalar_lea.vmem [#allocation3], %s165
          %s167 = smul.u32 16, %s23
          %s168 = smul.u32 2, %s24
          %s170 = ssub.s32 2048, 2048
          %171 = vsyncadd %s163, %s170
          %s172 = smul.addr %s167, 2
          %s173 = sadd.s32 %s168, %s172
          %s174 = smul.addr %s173, 64
          %s175 = scalar_lea.hbm %s0, %s174
          %s176 = sshll.u32 %s166, 4
          %s177 = int_to_ptr.vmem [resolvable:$true] %s176
          %182 = dma.hbm_to_vmem [thread:$0]  %s175, 2048, %s177, %s163, 128, 128, 8
        $region28: #{tpu_custom_call.1} parent=23 // pred_fallthru
          _
      $region24: #{tpu_custom_call.1} parent=5 // pred_fallthru
        _
      %p183 = scmp.le.s32.totalorder 1, %s16
      %p184 = scmp.lt.s32.totalorder %s16, 3
      %p185 = pnand %p183, %p184
      %p186 = pneg %p185
      // Predicated region
      $region29: #{tpu_custom_call.1} parent=5 // pred_check
        _
      $region30: #{tpu_custom_call.1} parent=5 // pred_check_branch
        %188 = sbr.rel (%p185) target = $region32
      $region31: #{tpu_custom_call.1} parent=5 // pred_region
        %s189 = ssub.s32 %s16, 1
        %s190 = sand.u32 %s43, 1
        %s191 = scalar_lea.sflag [#allocation4], %s190
        %s192 = sand.u32 %s43, 1
        %s193 = smul.addr %s192, 128
        %s194 = scalar_lea.vmem [#allocation3], %s193
        // Predicated region
        $region33: #{tpu_custom_call.1} parent=31 // pred_check
          %p195 = pneg %p56
        $region34: #{tpu_custom_call.1} parent=31 // pred_check_branch
          %197 = sbr.rel (%p195) target = $region36
        $region35: #{tpu_custom_call.1} parent=31 // pred_region
          %198 = dma.done %s191, 2048
        $region36: #{tpu_custom_call.1} parent=31 // pred_fallthru
          _
        // Predicated region
        $region37: #{tpu_custom_call.1} parent=31 // pred_check
          %p199 = pneg %p77
        $region38: #{tpu_custom_call.1} parent=31 // pred_check_branch
          %201 = sbr.rel (%p199) target = $region40
        $region39: #{tpu_custom_call.1} parent=31 // pred_region
          %202 = dma.done [#allocation7], 2048
        $region40: #{tpu_custom_call.1} parent=31 // pred_fallthru
          _
        %s203 = sand.u32 %s43, 1
        %s204 = scalar_lea.sflag [#allocation4], %s203
        %s205 = sand.u32 %s43, 1
        %s206 = smul.addr %s205, 128
        %s207 = scalar_lea.vmem [#allocation3], %s206
        %p208 = pneg %p56
        %p209 = pneg %p53
        %p210 = pneg %p77
        %p211 = pneg %p74
        %p212 = pneg %p98
        %p213 = pneg %p95
        %p214 = pneg %p124
        %p215 = pneg %p121
        %s216 = sand.u32 %s111, 1
        %s217 = scalar_lea.sflag [#allocation5], %s216
        %s218 = sand.u32 %s111, 1
        %s219 = smul.addr %s218, 128
        %s220 = scalar_lea.vmem [#allocation8], %s219
        %s221 = smul.u32 16, %s25
        %s222 = smul.u32 2, %s26
        %s223 = smul.u32 16, %s25
        %p225 = scmp.eq.s32.totalorder %s26, 0
        // Predicated region
        $region41: #{tpu_custom_call.1} parent=31 // pred_check
          %p226 = pneg %p225
        $region42: #{tpu_custom_call.1} parent=31 // pred_check_branch
          %228 = sbr.rel (%p226) target = $region44
        $region43: #{tpu_custom_call.1} parent=31 // pred_region
          %229 = vst [vmem:[#allocation2] sm:$0xff] 0.0
          %230 = vst [vmem:[#allocation2 + $0x8] sm:$0xff] 0.0
          %231 = vst [vmem:[#allocation2 + $0x10] sm:$0xff] 0.0
          %232 = vst [vmem:[#allocation2 + $0x18] sm:$0xff] 0.0
          %233 = vst [vmem:[#allocation2 + $0x20] sm:$0xff] 0.0
          %234 = vst [vmem:[#allocation2 + $0x28] sm:$0xff] 0.0
          %235 = vst [vmem:[#allocation2 + $0x30] sm:$0xff] 0.0
          %236 = vst [vmem:[#allocation2 + $0x38] sm:$0xff] 0.0
          %237 = vst [vmem:[#allocation2 + $0x40] sm:$0xff] 0.0
          %238 = vst [vmem:[#allocation2 + $0x48] sm:$0xff] 0.0
          %239 = vst [vmem:[#allocation2 + $0x50] sm:$0xff] 0.0
          %240 = vst [vmem:[#allocation2 + $0x58] sm:$0xff] 0.0
          %241 = vst [vmem:[#allocation2 + $0x60] sm:$0xff] 0.0
          %242 = vst [vmem:[#allocation2 + $0x68] sm:$0xff] 0.0
          %243 = vst [vmem:[#allocation2 + $0x70] sm:$0xff] 0.0
          %244 = vst [vmem:[#allocation2 + $0x78] sm:$0xff] 0.0
        $region44: #{tpu_custom_call.1} parent=31 // pred_fallthru
          _
        %s245 = smul.u32 %s26, 256
        %s246 = sshra.s32 %s245, 3
        %s247 = sand.u32 %s245, 7
        %s248 = smul.addr %s246, 4
        %s249 = scalar_lea.vmem [#allocation6], %s248
        %v250 = vld [vmem:[%s249] sm:$0xf]
        %v251 = vld [vmem:[%s249 + $0x4] sm:$0xf]
        %v252 = vld [vmem:[%s249 + $0x8] sm:$0xf]
        %v253 = vld [vmem:[%s249 + $0xc] sm:$0xf]
        %v254 = vld [vmem:[%s249 + $0x10] sm:$0xf]
        %v255 = vld [vmem:[%s249 + $0x14] sm:$0xf]
        %v256 = vld [vmem:[%s249 + $0x18] sm:$0xf]
        %v257 = vld [vmem:[%s249 + $0x1c] sm:$0xf]
        %v258 = vld [vmem:[%s249 + $0x20] sm:$0xf]
        %v259 = vld [vmem:[%s249 + $0x24] sm:$0xf]
        %v260 = vld [vmem:[%s249 + $0x28] sm:$0xf]
        %v261 = vld [vmem:[%s249 + $0x2c] sm:$0xf]
        %v262 = vld [vmem:[%s249 + $0x30] sm:$0xf]
        %v263 = vld [vmem:[%s249 + $0x34] sm:$0xf]
        %v264 = vld [vmem:[%s249 + $0x38] sm:$0xf]
        %v265 = vld [vmem:[%s249 + $0x3c] sm:$0xf]
        %v266 = vld [vmem:[%s249 + $0x40] sm:$0xf]
        %v267 = vld [vmem:[%s249 + $0x44] sm:$0xf]
        %v268 = vld [vmem:[%s249 + $0x48] sm:$0xf]
        %v269 = vld [vmem:[%s249 + $0x4c] sm:$0xf]
        %v270 = vld [vmem:[%s249 + $0x50] sm:$0xf]
        %v271 = vld [vmem:[%s249 + $0x54] sm:$0xf]
        %v272 = vld [vmem:[%s249 + $0x58] sm:$0xf]
        %v273 = vld [vmem:[%s249 + $0x5c] sm:$0xf]
        %v274 = vld [vmem:[%s249 + $0x60] sm:$0xf]
        %v275 = vld [vmem:[%s249 + $0x64] sm:$0xf]
        %v276 = vld [vmem:[%s249 + $0x68] sm:$0xf]
        %v277 = vld [vmem:[%s249 + $0x6c] sm:$0xf]
        %v278 = vld [vmem:[%s249 + $0x70] sm:$0xf]
        %v279 = vld [vmem:[%s249 + $0x74] sm:$0xf]
        %v280 = vld [vmem:[%s249 + $0x78] sm:$0xf]
        %v281 = vld [vmem:[%s249 + $0x7c] sm:$0xf]
        %v282 = vld [vmem:[#allocation2] sm:$0xff]
        %v283 = vld [vmem:[#allocation2 + $0x8] sm:$0xff]
        %v284 = vld [vmem:[#allocation2 + $0x10] sm:$0xff]
        %v285 = vld [vmem:[#allocation2 + $0x18] sm:$0xff]
        %v286 = vld [vmem:[#allocation2 + $0x20] sm:$0xff]
        %v287 = vld [vmem:[#allocation2 + $0x28] sm:$0xff]
        %v288 = vld [vmem:[#allocation2 + $0x30] sm:$0xff]
        %v289 = vld [vmem:[#allocation2 + $0x38] sm:$0xff]
        %v290 = vld [vmem:[#allocation2 + $0x40] sm:$0xff]
        %v291 = vld [vmem:[#allocation2 + $0x48] sm:$0xff]
        %v292 = vld [vmem:[#allocation2 + $0x50] sm:$0xff]
        %v293 = vld [vmem:[#allocation2 + $0x58] sm:$0xff]
        %v294 = vld [vmem:[#allocation2 + $0x60] sm:$0xff]
        %v295 = vld [vmem:[#allocation2 + $0x68] sm:$0xff]
        %v296 = vld [vmem:[#allocation2 + $0x70] sm:$0xff]
        %v297 = vld [vmem:[#allocation2 + $0x78] sm:$0xff]
        %v298 = vld [vmem:[%s194] sm:$0xff]
        %v299 = vld [vmem:[%s194 + $0x8] sm:$0xff]
        %v300 = vld [vmem:[%s194 + $0x10] sm:$0xff]
        %v301 = vld [vmem:[%s194 + $0x18] sm:$0xff]
        %v302 = vld [vmem:[%s194 + $0x20] sm:$0xff]
        %v303 = vld [vmem:[%s194 + $0x28] sm:$0xff]
        %v304 = vld [vmem:[%s194 + $0x30] sm:$0xff]
        %v305 = vld [vmem:[%s194 + $0x38] sm:$0xff]
        %v306 = vld [vmem:[%s194 + $0x40] sm:$0xff]
        %v307 = vld [vmem:[%s194 + $0x48] sm:$0xff]
        %v308 = vld [vmem:[%s194 + $0x50] sm:$0xff]
        %v309 = vld [vmem:[%s194 + $0x58] sm:$0xff]
        %v310 = vld [vmem:[%s194 + $0x60] sm:$0xff]
        %v311 = vld [vmem:[%s194 + $0x68] sm:$0xff]
        %v312 = vld [vmem:[%s194 + $0x70] sm:$0xff]
        %v313 = vld [vmem:[%s194 + $0x78] sm:$0xff]
        %v330 = vunpack.c.l.b16 %v298
        %v331 = vunpack.c.h.b16 %v298
        %v332 = vunpack.c.l.b16 %v299
        %v333 = vunpack.c.h.b16 %v299
        %v334 = vunpack.c.l.b16 %v300
        %v335 = vunpack.c.h.b16 %v300
        %v336 = vunpack.c.l.b16 %v301
        %v337 = vunpack.c.h.b16 %v301
        %v338 = vunpack.c.l.b16 %v302
        %v339 = vunpack.c.h.b16 %v302
        %v340 = vunpack.c.l.b16 %v303
        %v341 = vunpack.c.h.b16 %v303
        %v342 = vunpack.c.l.b16 %v304
        %v343 = vunpack.c.h.b16 %v304
        %v344 = vunpack.c.l.b16 %v305
        %v345 = vunpack.c.h.b16 %v305
        %v346 = vunpack.c.l.b16 %v306
        %v347 = vunpack.c.h.b16 %v306
        %v348 = vunpack.c.l.b16 %v307
        %v349 = vunpack.c.h.b16 %v307
        %v350 = vunpack.c.l.b16 %v308
        %v351 = vunpack.c.h.b16 %v308
        %v352 = vunpack.c.l.b16 %v309
        %v353 = vunpack.c.h.b16 %v309
        %v354 = vunpack.c.l.b16 %v310
        %v355 = vunpack.c.h.b16 %v310
        %v356 = vunpack.c.l.b16 %v311
        %v357 = vunpack.c.h.b16 %v311
        %v358 = vunpack.c.l.b16 %v312
        %v359 = vunpack.c.h.b16 %v312
        %v360 = vunpack.c.l.b16 %v313
        %v361 = vunpack.c.h.b16 %v313
        %v362 = vpack.c.b16 %v332, %v330
        %v363 = vpack.c.b16 %v333, %v331
        %v364 = vpack.c.b16 %v336, %v334
        %v365 = vpack.c.b16 %v337, %v335
        %v366 = vpack.c.b16 %v340, %v338
        %v367 = vpack.c.b16 %v341, %v339
        %v368 = vpack.c.b16 %v344, %v342
        %v369 = vpack.c.b16 %v345, %v343
        %v370 = vpack.c.b16 %v348, %v346
        %v371 = vpack.c.b16 %v349, %v347
        %v372 = vpack.c.b16 %v352, %v350
        %v373 = vpack.c.b16 %v353, %v351
        %v374 = vpack.c.b16 %v356, %v354
        %v375 = vpack.c.b16 %v357, %v355
        %v376 = vpack.c.b16 %v360, %v358
        %v377 = vpack.c.b16 %v361, %v359
        %v426 = vunpack.c.l.b16 %v250
        %v427 = vunpack.c.l.b16 %v251
        %v428 = vunpack.c.l.b16 %v252
        %v429 = vunpack.c.l.b16 %v253
        %v430 = vunpack.c.l.b16 %v254
        %v431 = vunpack.c.l.b16 %v255
        %v432 = vunpack.c.l.b16 %v256
        %v433 = vunpack.c.l.b16 %v257
        %v434 = vunpack.c.l.b16 %v258
        %v435 = vunpack.c.l.b16 %v259
        %v436 = vunpack.c.l.b16 %v260
        %v437 = vunpack.c.l.b16 %v261
        %v438 = vunpack.c.l.b16 %v262
        %v439 = vunpack.c.l.b16 %v263
        %v440 = vunpack.c.l.b16 %v264
        %v441 = vunpack.c.l.b16 %v265
        %v442 = vunpack.c.l.b16 %v266
        %v443 = vunpack.c.l.b16 %v267
        %v444 = vunpack.c.l.b16 %v268
        %v445 = vunpack.c.l.b16 %v269
        %v446 = vunpack.c.l.b16 %v270
        %v447 = vunpack.c.l.b16 %v271
        %v448 = vunpack.c.l.b16 %v272
        %v449 = vunpack.c.l.b16 %v273
        %v450 = vunpack.c.l.b16 %v274
        %v451 = vunpack.c.l.b16 %v275
        %v452 = vunpack.c.l.b16 %v276
        %v453 = vunpack.c.l.b16 %v277
        %v454 = vunpack.c.l.b16 %v278
        %v455 = vunpack.c.l.b16 %v279
        %v456 = vunpack.c.l.b16 %v280
        %v457 = vunpack.c.l.b16 %v281
        %v458 = vpack.c.b16 %v427, %v426
        %v459 = vpack.c.b16 %v429, %v428
        %v460 = vpack.c.b16 %v431, %v430
        %v461 = vpack.c.b16 %v433, %v432
        %v462 = vpack.c.b16 %v435, %v434
        %v463 = vpack.c.b16 %v437, %v436
        %v464 = vpack.c.b16 %v439, %v438
        %v465 = vpack.c.b16 %v441, %v440
        %v466 = vpack.c.b16 %v443, %v442
        %v467 = vpack.c.b16 %v445, %v444
        %v468 = vpack.c.b16 %v447, %v446
        %v469 = vpack.c.b16 %v449, %v448
        %v470 = vpack.c.b16 %v451, %v450
        %v471 = vpack.c.b16 %v453, %v452
        %v472 = vpack.c.b16 %v455, %v454
        %v473 = vpack.c.b16 %v457, %v456
        %490 = vmatprep.subr.bf16.mxu0 0
        %491 = vmatpush1.bf16.msra.mxu0 %v458
        %492 = vmatprep.subr.bf16.mxu0 0
        %493 = vmatpush1.bf16.msra.mxu0 %v459
        %494 = vmatprep.subr.bf16.mxu0 0
        %495 = vmatpush1.bf16.msra.mxu0 %v460
        %496 = vmatprep.subr.bf16.mxu0 0
        %497 = vmatpush1.bf16.msra.mxu0 %v461
        %498 = vmatprep.subr.bf16.mxu0 0
        %499 = vmatpush1.bf16.msra.mxu0 %v462
        %500 = vmatprep.subr.bf16.mxu0 0
        %501 = vmatpush1.bf16.msra.mxu0 %v463
        %502 = vmatprep.subr.bf16.mxu0 0
        %503 = vmatpush1.bf16.msra.mxu0 %v464
        %504 = vmatprep.subr.bf16.mxu0 0
        %505 = vmatpush1.bf16.msra.mxu0 %v465
        %506 = vmatprep.subr.bf16.mxu0 0
        %507 = vmatpush1.bf16.msra.mxu0 %v466
        %508 = vmatprep.subr.bf16.mxu0 0
        %509 = vmatpush1.bf16.msra.mxu0 %v467
        %510 = vmatprep.subr.bf16.mxu0 0
        %511 = vmatpush1.bf16.msra.mxu0 %v468
        %512 = vmatprep.subr.bf16.mxu0 0
        %513 = vmatpush1.bf16.msra.mxu0 %v469
        %514 = vmatprep.subr.bf16.mxu0 0
        %515 = vmatpush1.bf16.msra.mxu0 %v470
        %516 = vmatprep.subr.bf16.mxu0 0
        %517 = vmatpush1.bf16.msra.mxu0 %v471
        %518 = vmatprep.subr.bf16.mxu0 0
        %519 = vmatpush1.bf16.msra.mxu0 %v472
        %520 = vmatprep.subr.bf16.mxu0 0
        %521 = vmatpush1.bf16.msra.mxu0 %v473
        %522 = vmatprep.mubr.bf16.mxu0 %v363
        %523 = vmatmul.mubr.bf16.gmra.mrb[0].mxu0 %v362
        %v524 = vpop.f32.mrb[0].mxu0
        %v525 = vadd.f32 0.0, %v524
        %v526 = vpop.f32.mrb[0].mxu0
        %v527 = vpop.f32.mrb[0].mxu0
        %v528 = vadd.f32 0.0, %v527
        %v529 = vpop.f32.mrb[0].mxu0
        %530 = vmatprep.mubr.bf16.mxu0 %v365
        %531 = vmatmul.mubr.bf16.gmra.mrb[0].mxu0 %v364
        %v532 = vpop.f32.mrb[0].mxu0
        %v533 = vadd.f32 0.0, %v532
        %v534 = vpop.f32.mrb[0].mxu0
        %v535 = vpop.f32.mrb[0].mxu0
        %v536 = vadd.f32 0.0, %v535
        %v537 = vpop.f32.mrb[0].mxu0
        %538 = vmatprep.mubr.bf16.mxu0 %v367
        %539 = vmatmul.mubr.bf16.gmra.mrb[0].mxu0 %v366
        %v540 = vpop.f32.mrb[0].mxu0
        %v541 = vadd.f32 0.0, %v540
        %v542 = vpop.f32.mrb[0].mxu0
        %v543 = vpop.f32.mrb[0].mxu0
        %v544 = vadd.f32 0.0, %v543
        %v545 = vpop.f32.mrb[0].mxu0
        %546 = vmatprep.mubr.bf16.mxu0 %v369
        %547 = vmatmul.mubr.bf16.gmra.mrb[0].mxu0 %v368
        %v548 = vpop.f32.mrb[0].mxu0
        %v549 = vadd.f32 0.0, %v548
        %v550 = vpop.f32.mrb[0].mxu0
        %v551 = vpop.f32.mrb[0].mxu0
        %v552 = vadd.f32 0.0, %v551
        %v553 = vpop.f32.mrb[0].mxu0
        %554 = vmatprep.mubr.bf16.mxu0 %v371
        %555 = vmatmul.mubr.bf16.gmra.mrb[0].mxu0 %v370
        %v556 = vpop.f32.mrb[0].mxu0
        %v557 = vadd.f32 0.0, %v556
        %v558 = vpop.f32.mrb[0].mxu0
        %v559 = vpop.f32.mrb[0].mxu0
        %v560 = vadd.f32 0.0, %v559
        %v561 = vpop.f32.mrb[0].mxu0
        %562 = vmatprep.mubr.bf16.mxu0 %v373
        %563 = vmatmul.mubr.bf16.gmra.mrb[0].mxu0 %v372
        %v564 = vpop.f32.mrb[0].mxu0
        %v565 = vadd.f32 0.0, %v564
        %v566 = vpop.f32.mrb[0].mxu0
        %v567 = vpop.f32.mrb[0].mxu0
        %v568 = vadd.f32 0.0, %v567
        %v569 = vpop.f32.mrb[0].mxu0
        %570 = vmatprep.mubr.bf16.mxu0 %v375
        %571 = vmatmul.mubr.bf16.gmra.mrb[0].mxu0 %v374
        %v572 = vpop.f32.mrb[0].mxu0
        %v573 = vadd.f32 0.0, %v572
        %v574 = vpop.f32.mrb[0].mxu0
        %v575 = vpop.f32.mrb[0].mxu0
        %v576 = vadd.f32 0.0, %v575
        %v577 = vpop.f32.mrb[0].mxu0
        %578 = vmatprep.mubr.bf16.mxu0 %v377
        %579 = vmatmul.mubr.bf16.gmra.mrb[0].mxu0 %v376
        %v580 = vpop.f32.mrb[0].mxu0
        %v581 = vadd.f32 0.0, %v580
        %v582 = vpop.f32.mrb[0].mxu0
        %v583 = vpop.f32.mrb[0].mxu0
        %v584 = vadd.f32 0.0, %v583
        %v585 = vpop.f32.mrb[0].mxu0
        %586 = vdwg.mxu0
        %v587 = vadd.f32 %v282, %v525
        %v588 = vadd.f32 %v283, %v528
        %v589 = vadd.f32 %v284, %v533
        %v590 = vadd.f32 %v285, %v536
        %v591 = vadd.f32 %v286, %v541
        %v592 = vadd.f32 %v287, %v544
        %v593 = vadd.f32 %v288, %v549
        %v594 = vadd.f32 %v289, %v552
        %v595 = vadd.f32 %v290, %v557
        %v596 = vadd.f32 %v291, %v560
        %v597 = vadd.f32 %v292, %v565
        %v598 = vadd.f32 %v293, %v568
        %v599 = vadd.f32 %v294, %v573
        %v600 = vadd.f32 %v295, %v576
        %v601 = vadd.f32 %v296, %v581
        %v602 = vadd.f32 %v297, %v584
        %603 = vst [vmem:[#allocation2] sm:$0xff] %v587
        %604 = vst [vmem:[#allocation2 + $0x8] sm:$0xff] %v588
        %605 = vst [vmem:[#allocation2 + $0x10] sm:$0xff] %v589
        %606 = vst [vmem:[#allocation2 + $0x18] sm:$0xff] %v590
        %607 = vst [vmem:[#allocation2 + $0x20] sm:$0xff] %v591
        %608 = vst [vmem:[#allocation2 + $0x28] sm:$0xff] %v592
        %609 = vst [vmem:[#allocation2 + $0x30] sm:$0xff] %v593
        %610 = vst [vmem:[#allocation2 + $0x38] sm:$0xff] %v594
        %611 = vst [vmem:[#allocation2 + $0x40] sm:$0xff] %v595
        %612 = vst [vmem:[#allocation2 + $0x48] sm:$0xff] %v596
        %613 = vst [vmem:[#allocation2 + $0x50] sm:$0xff] %v597
        %614 = vst [vmem:[#allocation2 + $0x58] sm:$0xff] %v598
        %615 = vst [vmem:[#allocation2 + $0x60] sm:$0xff] %v599
        %616 = vst [vmem:[#allocation2 + $0x68] sm:$0xff] %v600
        %617 = vst [vmem:[#allocation2 + $0x70] sm:$0xff] %v601
        %618 = vst [vmem:[#allocation2 + $0x78] sm:$0xff] %v602
        // Predicated region
        $region45: #{tpu_custom_call.1} parent=31 // pred_check
          %p619 = pneg %p225
        $region46: #{tpu_custom_call.1} parent=31 // pred_check_branch
          %621 = sbr.rel (%p619) target = $region48
        $region47: #{tpu_custom_call.1} parent=31 // pred_region
          %v622 = vld [vmem:[#allocation2] sm:$0xff]
          %v623 = vld [vmem:[#allocation2 + $0x8] sm:$0xff]
          %v624 = vld [vmem:[#allocation2 + $0x10] sm:$0xff]
          %v625 = vld [vmem:[#allocation2 + $0x18] sm:$0xff]
          %v626 = vld [vmem:[#allocation2 + $0x20] sm:$0xff]
          %v627 = vld [vmem:[#allocation2 + $0x28] sm:$0xff]
          %v628 = vld [vmem:[#allocation2 + $0x30] sm:$0xff]
          %v629 = vld [vmem:[#allocation2 + $0x38] sm:$0xff]
          %v630 = vld [vmem:[#allocation2 + $0x40] sm:$0xff]
          %v631 = vld [vmem:[#allocation2 + $0x48] sm:$0xff]
          %v632 = vld [vmem:[#allocation2 + $0x50] sm:$0xff]
          %v633 = vld [vmem:[#allocation2 + $0x58] sm:$0xff]
          %v634 = vld [vmem:[#allocation2 + $0x60] sm:$0xff]
          %v635 = vld [vmem:[#allocation2 + $0x68] sm:$0xff]
          %v636 = vld [vmem:[#allocation2 + $0x70] sm:$0xff]
          %v637 = vld [vmem:[#allocation2 + $0x78] sm:$0xff]
          %v638 = vld [vmem:[%s2] sm:$0x1]
          %v640 = vlaneseq
          %v641 = vshrl.u32 %v640, 7
          %v642 = vsub.s32 0, %v641
          %v643 = vrot.slane %v638, %v642
          %v645 = vadd.f32 %v622, %v643
          %v646 = vadd.f32 %v623, %v643
          %v647 = vadd.f32 %v624, %v643
          %v648 = vadd.f32 %v625, %v643
          %v649 = vadd.f32 %v626, %v643
          %v650 = vadd.f32 %v627, %v643
          %v651 = vadd.f32 %v628, %v643
          %v652 = vadd.f32 %v629, %v643
          %v653 = vadd.f32 %v630, %v643
          %v654 = vadd.f32 %v631, %v643
          %v655 = vadd.f32 %v632, %v643
          %v656 = vadd.f32 %v633, %v643
          %v657 = vadd.f32 %v634, %v643
          %v658 = vadd.f32 %v635, %v643
          %v659 = vadd.f32 %v636, %v643
          %v660 = vadd.f32 %v637, %v643
          %661 = vst [vmem:[%s220] sm:$0xff] %v645
          %662 = vst [vmem:[%s220 + $0x8] sm:$0xff] %v646
          %663 = vst [vmem:[%s220 + $0x10] sm:$0xff] %v647
          %664 = vst [vmem:[%s220 + $0x18] sm:$0xff] %v648
          %665 = vst [vmem:[%s220 + $0x20] sm:$0xff] %v649
          %666 = vst [vmem:[%s220 + $0x28] sm:$0xff] %v650
          %667 = vst [vmem:[%s220 + $0x30] sm:$0xff] %v651
          %668 = vst [vmem:[%s220 + $0x38] sm:$0xff] %v652
          %669 = vst [vmem:[%s220 + $0x40] sm:$0xff] %v653
          %670 = vst [vmem:[%s220 + $0x48] sm:$0xff] %v654
          %671 = vst [vmem:[%s220 + $0x50] sm:$0xff] %v655
          %672 = vst [vmem:[%s220 + $0x58] sm:$0xff] %v656
          %673 = vst [vmem:[%s220 + $0x60] sm:$0xff] %v657
          %674 = vst [vmem:[%s220 + $0x68] sm:$0xff] %v658
          %675 = vst [vmem:[%s220 + $0x70] sm:$0xff] %v659
          %676 = vst [vmem:[%s220 + $0x78] sm:$0xff] %v660
        $region48: #{tpu_custom_call.1} parent=31 // pred_fallthru
          _
        %s677 = sand.u32 %s111, 1
        %s678 = scalar_lea.sflag [#allocation5], %s677
        %s679 = sand.u32 %s111, 1
        %s680 = smul.addr %s679, 128
        %s681 = scalar_lea.vmem [#allocation8], %s680
        // Predicated region
        $region49: #{tpu_custom_call.1} parent=31 // pred_check
          %p682 = pneg %p121
        $region50: #{tpu_custom_call.1} parent=31 // pred_check_branch
          %684 = sbr.rel (%p682) target = $region52
        $region51: #{tpu_custom_call.1} parent=31 // pred_region
          %s685 = smul.u32 16, %s25
          %s687 = ssub.s32 2048, 2048
          %688 = vsyncadd %s678, %s687
          %s689 = smul.addr %s685, 128
          %s690 = scalar_lea.hbm %s3, %s689
          %s691 = sshll.u32 %s681, 4
          %s692 = int_to_ptr.vmem [resolvable:$true] %s691
          %697 = dma.vmem_to_hbm [thread:$0]  %s692, 2048, %s690, %s678, 128, 128, 8
        $region52: #{tpu_custom_call.1} parent=31 // pred_fallthru
          _
      $region32: #{tpu_custom_call.1} parent=5 // pred_fallthru
        _
      %p698 = scmp.le.s32.totalorder 2, %s16
      // Predicated region
      $region53: #{tpu_custom_call.1} parent=5 // pred_check
        %p699 = pneg %p698
      $region54: #{tpu_custom_call.1} parent=5 // pred_check_branch
        %701 = sbr.rel (%p699) target = $region56
      $region55: #{tpu_custom_call.1} parent=5 // pred_region
        %s702 = ssub.s32 %s16, 2
        // Predicated region
        $region57: #{tpu_custom_call.1} parent=55 // pred_check
          %p703 = pneg %p127
        $region58: #{tpu_custom_call.1} parent=55 // pred_check_branch
          %705 = sbr.rel (%p703) target = $region60
        $region59: #{tpu_custom_call.1} parent=55 // pred_region
          %s706 = sand.u32 %s112, 1
          %s707 = scalar_lea.sflag [#allocation5], %s706
          %s708 = sand.u32 %s112, 1
          %s709 = smul.addr %s708, 128
          %s710 = scalar_lea.vmem [#allocation8], %s709
          %711 = dma.done %s707, 2048
        $region60: #{tpu_custom_call.1} parent=55 // pred_fallthru
          _
      $region56: #{tpu_custom_call.1} parent=5 // pred_fallthru
        _
    $region6: #{tpu_custom_call.1} parent=1 // loop_footer
      %s20 = sadd.s32 1, %s16
    $region7: #{tpu_custom_call.1} parent=1 // loop_footer_branch
      %15 = sbr.rel target = $region3
    $region8: #{tpu_custom_call.1} parent=1 // loop_exit
      _
    %712 = vsyncpa [#allocation4], 1
    %s713 = scalar_lea.sflag [#allocation4], 1
    %714 = vsyncpa %s713, 1
    %715 = vsyncpa [#allocation7], 1
    %716 = vsyncpa [#allocation5], 1
    %s717 = scalar_lea.sflag [#allocation5], 1
    %718 = vsyncpa %s717, 1

</llo_original>
